<compile_context>
chip_gen: v6e
topology: v6e:2x2x1
jax: 0.10.0
libtpu: 0.0.40
codegen_flags: <defaults>
</compile_context>

<pallas_src>
import math

import jax
import jax.numpy as jnp
from jax import lax
from jax.experimental import pallas as pl
from jax.experimental.pallas import tpu as pltpu


def _embed_mean_linear_kernel(ids_ref, emb_ref, w_ref, o_ref, acc_ref):
    """Fused: counts(ids) @ emb_tile accumulated over vocab tiles, then
    (acc / S) @ w on the last vocab tile."""
    tb, seq = ids_ref.shape          # batch tile, sequence length
    tv = emb_ref.shape[0]            # vocab tile size
    k = pl.program_id(1)             # vocab-tile (reduction) index

    @pl.when(k == 0)
    def _init():
        acc_ref[...] = jnp.zeros_like(acc_ref)

    ids = ids_ref[...]                                               # [tb, seq] int32
    v_ids = k * tv + lax.broadcasted_iota(jnp.int32, (tb, seq, tv), 2)
    one_hot = (ids[:, :, None] == v_ids).astype(emb_ref.dtype)       # [tb, seq, tv]
    counts = jnp.sum(one_hot, axis=1)                                # [tb, tv]

    # gather + partial sum over the sequence == counts @ embedding tile (MXU)
    acc_ref[...] += jnp.dot(counts, emb_ref[...],
                            preferred_element_type=jnp.float32)      # [tb, D] f32

    @pl.when(k == pl.num_programs(1) - 1)
    def _finalize():
        mean_emb = acc_ref[...] * (1.0 / seq)                        # mean over sequence
        o_ref[...] = jnp.dot(mean_emb.astype(w_ref.dtype), w_ref[...],
                             preferred_element_type=jnp.float32
                             ).astype(o_ref.dtype)                   # [tb, O_pad]


def mlp_forward(ids, emb_table, w_out, *, batch_tile=8, vocab_tile=256):
    """ids: [B, S] int; emb_table: [V, D]; w_out: [D, O] (= torch Linear.weight.T)."""
    B, S = ids.shape
    V, D = emb_table.shape
    Dw, O = w_out.shape
    assert Dw == D

    TB = batch_tile
    TV = min(vocab_tile, max(8, V))
    B_pad = pl.cdiv(B, TB) * TB
    V_pad = pl.cdiv(V, TV) * TV
    O_pad = pl.cdiv(O, 128) * 128      # lane-dense output block -> unmasked stores

    ids_p = ids.astype(jnp.int32)
    if B_pad != B:
        ids_p = jnp.pad(ids_p, ((0, B_pad - B), (0, 0)))             # pad rows: id 0
    emb_p = emb_table if V_pad == V else jnp.pad(emb_table, ((0, V_pad - V), (0, 0)))
    w_p = w_out if O_pad == O else jnp.pad(w_out, ((0, 0), (0, O_pad - O)))

    grid = (B_pad // TB, V_pad // TV)  # (parallel batch tiles, vocab reduction)
    out = pl.pallas_call(
        _embed_mean_linear_kernel,
        out_shape=jax.ShapeDtypeStruct((B_pad, O_pad), jnp.float32),
        grid=grid,
        in_specs=[
            pl.BlockSpec((TB, S), lambda i, k: (i, 0)),      # token ids (resident over k)
            pl.BlockSpec((TV, D), lambda i, k: (k, 0)),      # embedding vocab tile
            pl.BlockSpec((D, O_pad), lambda i, k: (0, 0)),   # output weight (resident)
        ],
        out_specs=pl.BlockSpec((TB, O_pad), lambda i, k: (i, 0)),
        scratch_shapes=[pltpu.VMEM((TB, D), jnp.float32)],   # summed-embedding accumulator
        compiler_params=pltpu.CompilerParams(
            dimension_semantics=("parallel", "arbitrary")),
    )(ids_p, emb_p, w_p)
    return out[:B, :O]


def mlp_reference(ids, emb_table, w_out):
    """Pure-JAX reference of the PyTorch forward."""
    emb = jnp.take(emb_table, ids, axis=0).astype(jnp.float32)   # [B, S, D]
    mean_emb = jnp.mean(emb, axis=1)                             # [B, D]
    return jnp.dot(mean_emb, w_out.astype(jnp.float32),
                   precision=lax.Precision.HIGHEST)


if __name__ == "__main__":
    key = jax.random.PRNGKey(0)
    k_emb, k_w, k_ids = jax.random.split(key, 3)

    B, S = 2, 8
    V, D = 1000, 300          # D = 300 is fixed by nn.Linear(300, num_outputs)
    num_outputs = 3
    hidden_size = 32          # MLP ctor arg; unused by its forward (kept for parity)

    # "pretrained" embedding table + bias-free output projection (stored as W.T).
    emb_table = jax.random.normal(k_emb, (V, D), dtype=jnp.float32)
    bound = 1.0 / math.sqrt(D)
    w_out = jax.random.uniform(k_w, (D, num_outputs),
                               minval=-bound, maxval=bound, dtype=jnp.float32)
    ids = jax.random.randint(k_ids, (B, S), 0, V, dtype=jnp.int32)

    logits = jax.block_until_ready(mlp_forward(ids, emb_table, w_out))
    ref = mlp_reference(ids, emb_table, w_out)

    assert logits.shape == (B, num_outputs)
    assert jnp.allclose(logits, ref, rtol=1e-3, atol=1e-3)
    print("KERNEL_OK")
</pallas_src>

<mosaic_0001>
module attributes {stable_mosaic.version = 11 : i64} {
  func.func @_embed_mean_linear_kernel(%arg0: i32, %arg1: i32, %arg2: memref<8x8xi32, #tpu.memory_space<vmem>>, %arg3: memref<256x300xf32, #tpu.memory_space<vmem>>, %arg4: memref<300x128xf32, #tpu.memory_space<vmem>>, %arg5: memref<8x128xf32, #tpu.memory_space<vmem>>, %arg6: memref<8x300xf32, #tpu.memory_space<vmem>>) attributes {dimension_semantics = [#tpu.dimension_semantics<parallel>, #tpu.dimension_semantics<arbitrary>], iteration_bounds = array<i64: 1, 4>, scalar_prefetch = 0 : i64, scratch_operands = 1 : i64, tpu.core_type = #tpu.core_type<tc>, window_params = [{transform_indices = @transform_0, window_bounds = array<i64: 8, 8>}, {transform_indices = @transform_1, window_bounds = array<i64: 256, 300>}, {pipeline_mode = #tpu.pipeline_mode<synchronous>, transform_indices = @transform_2, window_bounds = array<i64: 300, 128>}, {transform_indices = @transform_3, window_bounds = array<i64: 8, 128>}]} {
    %c0_i32 = arith.constant 0 : i32
    %0 = arith.cmpi eq, %arg1, %c0_i32 : i32
    %1 = arith.extui %0 : i1 to i32
    %c0_i32_0 = arith.constant 0 : i32
    %2 = arith.cmpi ne, %1, %c0_i32_0 : i32
    scf.if %2 {
      %cst_10 = arith.constant 0.000000e+00 : f32
      %22 = vector.broadcast %cst_10 : f32 to vector<8x300xf32>
      %c0_11 = arith.constant 0 : index
      %c0_12 = arith.constant 0 : index
      %23 = vector.load %arg6[%c0_11, %c0_12] : memref<8x300xf32, #tpu.memory_space<vmem>>, vector<8x300xf32>
      tpu.vector_store %arg6[%c0_11, %c0_12], %22 {strides = array<i32>} : memref<8x300xf32, #tpu.memory_space<vmem>>, vector<8x300xf32>,
    } else {
    }
    %c0 = arith.constant 0 : index
    %c0_1 = arith.constant 0 : index
    %3 = vector.load %arg2[%c0, %c0_1] : memref<8x8xi32, #tpu.memory_space<vmem>>, vector<8x8xi32>
    %c256_i32 = arith.constant 256 : i32
    %4 = arith.muli %arg1, %c256_i32 : i32
    %5 = tpu.iota {dimensions = array<i32: 2>} : vector<8x8x256xi32>
    %6 = vector.broadcast %4 : i32 to vector<8x8x256xi32>
    %7 = arith.addi %6, %5 : vector<8x8x256xi32>
    %8 = vector.shape_cast %3 : vector<8x8xi32> to vector<8x8x1xi32>
    %9 = vector.broadcast %8 : vector<8x8x1xi32> to vector<8x8x256xi32>
    %10 = arith.cmpi eq, %9, %7 : vector<8x8x256xi32>
    %11 = arith.extui %10 : vector<8x8x256xi1> to vector<8x8x256xi32>
    %12 = arith.sitofp %11 : vector<8x8x256xi32> to vector<8x8x256xf32>
    %cst = arith.constant dense<0.000000e+00> : vector<8x256xf32>
    %13 = vector.multi_reduction <add>, %12, %cst [1] : vector<8x8x256xf32> to vector<8x256xf32>
    %c0_2 = arith.constant 0 : index
    %c0_3 = arith.constant 0 : index
    %14 = vector.load %arg6[%c0_2, %c0_3] : memref<8x300xf32, #tpu.memory_space<vmem>>, vector<8x300xf32>
    %c0_4 = arith.constant 0 : index
    %c0_5 = arith.constant 0 : index
    %15 = vector.load %arg3[%c0_4, %c0_5] : memref<256x300xf32, #tpu.memory_space<vmem>>, vector<256x300xf32>
    %cst_6 = arith.constant dense<0.000000e+00> : vector<8x300xf32>
    %16 = tpu.matmul %13, %15, %cst_6 {dimension_numbers = #tpu.dot_dimension_numbers<[1], [0], [0], [1], [0, 0, 1, 1], [], []>} : vector<8x256xf32>, vector<256x300xf32>, vector<8x300xf32> -> vector<8x300xf32>
    %17 = arith.addf %14, %16 : vector<8x300xf32>
    %c0_7 = arith.constant 0 : index
    %c0_8 = arith.constant 0 : index
    %18 = vector.load %arg6[%c0_7, %c0_8] : memref<8x300xf32, #tpu.memory_space<vmem>>, vector<8x300xf32>
    tpu.vector_store %arg6[%c0_7, %c0_8], %17 {strides = array<i32>} : memref<8x300xf32, #tpu.memory_space<vmem>>, vector<8x300xf32>,
    %c3_i32 = arith.constant 3 : i32
    %19 = arith.cmpi eq, %arg1, %c3_i32 : i32
    %20 = arith.extui %19 : i1 to i32
    %c0_i32_9 = arith.constant 0 : i32
    %21 = arith.cmpi ne, %20, %c0_i32_9 : i32
    scf.if %21 {
      %c0_10 = arith.constant 0 : index
      %c0_11 = arith.constant 0 : index
      %22 = vector.load %arg6[%c0_10, %c0_11] : memref<8x300xf32, #tpu.memory_space<vmem>>, vector<8x300xf32>
      %cst_12 = arith.constant 1.250000e-01 : f32
      %23 = vector.broadcast %cst_12 : f32 to vector<8x300xf32>
      %24 = arith.mulf %22, %23 : vector<8x300xf32>
      %c0_13 = arith.constant 0 : index
      %c0_14 = arith.constant 0 : index
      %25 = vector.load %arg4[%c0_13, %c0_14] : memref<300x128xf32, #tpu.memory_space<vmem>>, vector<300x128xf32>
      %cst_15 = arith.constant dense<0.000000e+00> : vector<8x128xf32>
      %26 = tpu.matmul %24, %25, %cst_15 {dimension_numbers = #tpu.dot_dimension_numbers<[1], [0], [0], [1], [0, 0, 1, 1], [], []>} : vector<8x300xf32>, vector<300x128xf32>, vector<8x128xf32> -> vector<8x128xf32>
      %c0_16 = arith.constant 0 : index
      %c0_17 = arith.constant 0 : index
      %27 = vector.load %arg5[%c0_16, %c0_17] : memref<8x128xf32, #tpu.memory_space<vmem>>, vector<8x128xf32>
      tpu.vector_store %arg5[%c0_16, %c0_17], %26 {strides = array<i32>} : memref<8x128xf32, #tpu.memory_space<vmem>>, vector<8x128xf32>,
    } else {
    }
    return
  }
  func.func @transform_0(%arg0: i32, %arg1: i32) -> (i32, i32) {
    %c0_i32 = arith.constant 0 : i32
    %c0_i32_0 = arith.constant 0 : i32
    return %arg0, %c0_i32 : i32, i32
  }
  func.func @transform_1(%arg0: i32, %arg1: i32) -> (i32, i32) {
    %c0_i32 = arith.constant 0 : i32
    %c0_i32_0 = arith.constant 0 : i32
    return %arg1, %c0_i32 : i32, i32
  }
  func.func @transform_2(%arg0: i32, %arg1: i32) -> (i32, i32) {
    %c0_i32 = arith.constant 0 : i32
    %c0_i32_0 = arith.constant 0 : i32
    %c0_i32_1 = arith.constant 0 : i32
    return %c0_i32, %c0_i32_0 : i32, i32
  }
  func.func @transform_3(%arg0: i32, %arg1: i32) -> (i32, i32) {
    %c0_i32 = arith.constant 0 : i32
    %c0_i32_0 = arith.constant 0 : i32
    return %arg0, %c0_i32 : i32, i32
  }
}

</mosaic_0001>

<llo_original>
// kernel: tpu_custom_call.1
$region0: #{tpu_custom_call.1}
  #allocation0 [shape = 'u32[]', space=smem, size = 0x4, offset = 0x4, fixed_abs, tag = 'smem constant byte address 0x4 - core index']
  #allocation1 [shape = 'u32[144,128]{1,0:T(1,128)}', space=vmem, size = 0x12000, scoped, tag = 'internal scratch']
  #allocation2 [shape = 'f32[8,300]{1,0:T(8,128)}', space=vmem, size = 0x3000, scoped, tag = 'scratch operand']
  %s0 = inlined_call_operand.vmem [shape: s32[8,8], index: 0, kind: input, shape index: {}]
  %s1 = inlined_call_operand.vmem [shape: f32[1024,300], index: 1, kind: input, shape index: {}]
  %s2 = inlined_call_operand.vmem [shape: f32[300,128], index: 2, kind: input, shape index: {}]
  %s3 = inlined_call_operand.hbm [shape: f32[8,128], index: 3, kind: output, shape index: {}]
  %s4 = sld [smem:[#allocation0]]
  $region53: #{tpu_custom_call.1} parent=0
    _
  %s6 = ssub.s32 1, %s4
  %s7 = scalar_select 0, %s6, %s4
  $region1: #{tpu_custom_call.1} parent=0
    #allocation3 [shape = 'u8[4096]{0}', space=vmem, size = 0x1000, scoped, tag = 'output window, operand 0, single buffered']
    #allocation4 [shape = 's32[2]{0}', space=sflag, size = 0x8, scoped, tag = 'scoped memory for tpu_custom_call.1']
    %8 = vsyncpa [#allocation4], 0
    loop: start=0, step=1, limit=6
    $region2: #{tpu_custom_call.1} parent=1 // loop_pre_header
      _
    $region3: #{tpu_custom_call.1} parent=1 // loop_header
      %s10 = sphi 0, %s14
      %p11 = scmp.ge.s32.totalorder %s10, 6
      %s17 = sphi 0, %s29
      %s18 = sphi 0, %s25
      %s19 = sphi 0, %s17
      %s20 = sphi 0, %s18
      %s21 = sphi 0, %s19
      %s22 = sphi 0, %s20
      %s32 = sphi 0, %s34
      %s35 = sphi 0, %s32
      %s36 = sphi 0, %s35
      %s52 = sphi 0, %s36
      %s58 = sphi 0, %s60
      %s61 = sphi 0, %s58
      %s62 = sphi 0, %s61
      %s78 = sphi 0, %s62
      %s82 = sphi 0, %s82
      %s84 = sphi 0, %s82
      %s85 = sphi 0, %s84
      %s99 = sphi 0, %s85
      %s105 = sphi 0, %s107
      %s108 = sphi 0, %s105
      %s109 = sphi 0, %s108
      %s125 = sphi 0, %s109
    $region4: #{tpu_custom_call.1} parent=1 // loop_header_branch
      %13 = sbr.rel (%p11) target = $region8
    $region5: #{tpu_custom_call.1} parent=1 // loop_body
      %s15 = ssub.s32 %s10, 1
      %s16 = ssub.s32 %s10, 2
      %s23 = sadd.s32 1, %s18
      %p24 = scmp.ge.s32.totalorder %s23, 4
      %s25 = scalar_select %p24, 0, %s23
      %s26 = sadd.s32 1, %s17
      %s27 = scalar_select %p24, %s26, %s17
      %p28 = scmp.ge.s32.totalorder %s27, 1
      %s29 = scalar_select %p28, 0, %s27
      %s30 = ssub.s32 %s17, %s29
      %p31 = scmp.eq.s32.totalorder %s30, 0
      %s33 = sadd.s32 %s32, 1
      %s34 = scalar_select %p31, %s32, %s33
      %p37 = pneg %p31
      %p38 = scmp.eq.s32.totalorder %s10, 3
      %p39 = por %p37, %p38
      %p40 = scmp.ne.s32.totalorder %s32, %s35
      %p41 = scmp.eq.s32.totalorder %s10, 0
      %p42 = por %p40, %p41
      %p43 = scmp.ne.s32.totalorder %s32, %s35
      %p44 = scmp.eq.s32.totalorder %s15, 3
      %p45 = por %p43, %p44
      %p46 = scmp.ne.s32.totalorder %s35, %s36
      %p47 = scmp.eq.s32.totalorder %s15, 0
      %p48 = por %p46, %p47
      %p49 = scmp.ne.s32.totalorder %s35, %s36
      %p50 = scmp.eq.s32.totalorder %s16, 3
      %p51 = por %p49, %p50
      %p53 = scmp.ne.s32.totalorder %s36, %s52
      %p54 = scmp.eq.s32.totalorder %s16, 0
      %p55 = por %p53, %p54
      %s56 = ssub.s32 %s18, %s25
      %p57 = scmp.eq.s32.totalorder %s56, 0
      %s59 = sadd.s32 %s58, 1
      %s60 = scalar_select %p57, %s58, %s59
      %p63 = pneg %p57
      %p64 = scmp.eq.s32.totalorder %s10, 3
      %p65 = por %p63, %p64
      %p66 = scmp.ne.s32.totalorder %s58, %s61
      %p67 = scmp.eq.s32.totalorder %s10, 0
      %p68 = por %p66, %p67
      %p69 = scmp.ne.s32.totalorder %s58, %s61
      %p70 = scmp.eq.s32.totalorder %s15, 3
      %p71 = por %p69, %p70
      %p72 = scmp.ne.s32.totalorder %s61, %s62
      %p73 = scmp.eq.s32.totalorder %s15, 0
      %p74 = por %p72, %p73
      %p75 = scmp.ne.s32.totalorder %s61, %s62
      %p76 = scmp.eq.s32.totalorder %s16, 3
      %p77 = por %p75, %p76
      %p79 = scmp.ne.s32.totalorder %s62, %s78
      %p80 = scmp.eq.s32.totalorder %s16, 0
      %p81 = por %p79, %p80
      %s83 = sadd.s32 %s82, 1
      %p86 = scmp.eq.s32.totalorder %s10, 3
      %p87 = scmp.ne.s32.totalorder %s82, %s84
      %p88 = scmp.eq.s32.totalorder %s10, 0
      %p89 = por %p87, %p88
      %p90 = scmp.ne.s32.totalorder %s82, %s84
      %p91 = scmp.eq.s32.totalorder %s15, 3
      %p92 = por %p90, %p91
      %p93 = scmp.ne.s32.totalorder %s84, %s85
      %p94 = scmp.eq.s32.totalorder %s15, 0
      %p95 = por %p93, %p94
      %p96 = scmp.ne.s32.totalorder %s84, %s85
      %p97 = scmp.eq.s32.totalorder %s16, 3
      %p98 = por %p96, %p97
      %p100 = scmp.ne.s32.totalorder %s85, %s99
      %p101 = scmp.eq.s32.totalorder %s16, 0
      %p102 = por %p100, %p101
      %s103 = ssub.s32 %s17, %s29
      %p104 = scmp.eq.s32.totalorder %s103, 0
      %s106 = sadd.s32 %s105, 1
      %s107 = scalar_select %p104, %s105, %s106
      %p110 = pneg %p104
      %p111 = scmp.eq.s32.totalorder %s10, 3
      %p112 = por %p110, %p111
      %p113 = scmp.ne.s32.totalorder %s105, %s108
      %p114 = scmp.eq.s32.totalorder %s10, 0
      %p115 = por %p113, %p114
      %p116 = scmp.ne.s32.totalorder %s105, %s108
      %p117 = scmp.eq.s32.totalorder %s15, 3
      %p118 = por %p116, %p117
      %p119 = scmp.ne.s32.totalorder %s108, %s109
      %p120 = scmp.eq.s32.totalorder %s15, 0
      %p121 = por %p119, %p120
      %p122 = scmp.ne.s32.totalorder %s108, %s109
      %p123 = scmp.eq.s32.totalorder %s16, 3
      %p124 = por %p122, %p123
      %p126 = scmp.ne.s32.totalorder %s109, %s125
      %p127 = scmp.eq.s32.totalorder %s16, 0
      %p128 = por %p126, %p127
      %p129 = scmp.le.s32.totalorder 1, %s10
      %p130 = scmp.lt.s32.totalorder %s10, 5
      %p131 = pnand %p129, %p130
      %p132 = pneg %p131
      // Predicated region
      $region9: #{tpu_custom_call.1} parent=5 // pred_check
        _
      $region10: #{tpu_custom_call.1} parent=5 // pred_check_branch
        %134 = sbr.rel (%p131) target = $region12
      $region11: #{tpu_custom_call.1} parent=5 // pred_region
        %s135 = ssub.s32 %s10, 1
        // Predicated region
        $region13: #{tpu_custom_call.1} parent=11 // pred_check
          %p136 = pneg %p48
        $region14: #{tpu_custom_call.1} parent=11 // pred_check_branch
          %138 = sbr.rel (%p136) target = $region16
        $region15: #{tpu_custom_call.1} parent=11 // pred_region
          %p139 = scmp.lt.s32.totalorder %s19, 0
          %s140 = scalar_select %p139, %s19, 0
          %s141 = smul.addr %s140, 8
          %s142 = scalar_lea.vmem %s0, %s141
        $region16: #{tpu_custom_call.1} parent=11 // pred_fallthru
          _
        // Predicated region
        $region17: #{tpu_custom_call.1} parent=11 // pred_check
          %p143 = pneg %p95
        $region18: #{tpu_custom_call.1} parent=11 // pred_check_branch
          %145 = sbr.rel (%p143) target = $region20
        $region19: #{tpu_custom_call.1} parent=11 // pred_region
          _
        $region20: #{tpu_custom_call.1} parent=11 // pred_fallthru
          _
      $region12: #{tpu_custom_call.1} parent=5 // pred_fallthru
        _
      %p146 = scmp.lt.s32.totalorder %s10, 4
      // Predicated region
      $region21: #{tpu_custom_call.1} parent=5 // pred_check
        %p147 = pneg %p146
      $region22: #{tpu_custom_call.1} parent=5 // pred_check_branch
        %149 = sbr.rel (%p147) target = $region24
      $region23: #{tpu_custom_call.1} parent=5 // pred_region
        // Predicated region
        $region25: #{tpu_custom_call.1} parent=23 // pred_check
          %p150 = pneg %p68
        $region26: #{tpu_custom_call.1} parent=23 // pred_check_branch
          %152 = sbr.rel (%p150) target = $region28
        $region27: #{tpu_custom_call.1} parent=23 // pred_region
          %s153 = smul.u32 32, %s18
          %p154 = scmp.lt.s32.totalorder %s153, 127
          %s155 = scalar_select %p154, %s153, 127
          %s156 = smul.addr %s155, 3
          %s157 = smul.addr %s156, 8
          %s158 = scalar_lea.vmem %s1, %s157
          %s159 = smul.u32 32, %s18
        $region28: #{tpu_custom_call.1} parent=23 // pred_fallthru
          _
      $region24: #{tpu_custom_call.1} parent=5 // pred_fallthru
        _
      %p160 = scmp.le.s32.totalorder 1, %s10
      %p161 = scmp.lt.s32.totalorder %s10, 5
      %p162 = pnand %p160, %p161
      %p163 = pneg %p162
      // Predicated region
      $region29: #{tpu_custom_call.1} parent=5 // pred_check
        _
      $region30: #{tpu_custom_call.1} parent=5 // pred_check_branch
        %165 = sbr.rel (%p162) target = $region32
      $region31: #{tpu_custom_call.1} parent=5 // pred_region
        %s166 = ssub.s32 %s10, 1
        %p167 = scmp.lt.s32.totalorder %s19, 0
        %s168 = scalar_select %p167, %s19, 0
        %s169 = smul.addr %s168, 8
        %s170 = scalar_lea.vmem %s0, %s169
        %p171 = pneg %p48
        %p172 = pneg %p45
        %s173 = smul.u32 32, %s20
        %p174 = scmp.lt.s32.totalorder %s173, 127
        %s175 = scalar_select %p174, %s173, 127
        %s176 = smul.addr %s175, 3
        %s177 = smul.addr %s176, 8
        %s178 = scalar_lea.vmem %s1, %s177
        %p179 = pneg %p74
        %p180 = pneg %p71
        %p181 = pneg %p95
        %p182 = pneg %p92
        %p183 = pneg %p121
        %p184 = pneg %p118
        %p185 = scmp.lt.s32.totalorder %s19, 0
        %s186 = scalar_select %p185, %s19, 0
        %s187 = smul.addr %s186, 8
        %s188 = scalar_lea.vmem %s0, %s187
        %s189 = smul.u32 32, %s20
        %p190 = scmp.lt.s32.totalorder %s189, 127
        %s191 = scalar_select %p190, %s189, 127
        %s192 = smul.addr %s191, 3
        %s193 = smul.addr %s192, 8
        %s194 = scalar_lea.vmem %s1, %s193
        %s195 = smul.u32 32, %s20
        %p196 = scmp.eq.s32.totalorder %s20, 0
        // Predicated region
        $region33: #{tpu_custom_call.1} parent=31 // pred_check
          %p197 = pneg %p196
        $region34: #{tpu_custom_call.1} parent=31 // pred_check_branch
          %199 = sbr.rel (%p197) target = $region36
        $region35: #{tpu_custom_call.1} parent=31 // pred_region
          %200 = vst [vmem:[#allocation2] sm:$0xff] 0.0
          %201 = vst [vmem:[#allocation2 + $0x8] sm:$0xff] 0.0
          %vm202 = vcmask 359424
          %203 = vst.msk [vmem:[#allocation2 + $0x10] sm:$0xff] %vm202, 0.0
        $region36: #{tpu_custom_call.1} parent=31 // pred_fallthru
          _
        %v204 = vld [vmem:[%s188] sm:$0xff]
        %s205 = smul.u32 %s20, 256
        %v206 = vlaneseq
        %v207 = vand.u32 %v206, 127
        %v208 = vadd.s32 %v207, 128
        %v209 = vstv %s205
        %v210 = vadd.s32 %v209, %v207
        %v211 = vadd.s32 %v209, %v208
        %v212 = vlaneseq
        %v213 = vshrl.u32 %v212, 7
        %v214 = vsub.s32 0, %v213
        %v215 = vrot.slane %v204, %v214
        %217 = vbcast.lane.b32.xlu0 %v215, 256
        %v218 = vpop.permute.xlu0 %217
        %v219 = vlaneseq
        %v220 = vshrl.u32 %v219, 7
        %v221 = vsub.s32 1, %v220
        %v222 = vrot.slane %v204, %v221
        %224 = vbcast.lane.b32.xlu0 %v222, 256
        %v225 = vpop.permute.xlu0 %224
        %v226 = vlaneseq
        %v227 = vshrl.u32 %v226, 7
        %v228 = vsub.s32 2, %v227
        %v229 = vrot.slane %v204, %v228
        %231 = vbcast.lane.b32.xlu0 %v229, 256
        %v232 = vpop.permute.xlu0 %231
        %v233 = vlaneseq
        %v234 = vshrl.u32 %v233, 7
        %v235 = vsub.s32 3, %v234
        %v236 = vrot.slane %v204, %v235
        %238 = vbcast.lane.b32.xlu0 %v236, 256
        %v239 = vpop.permute.xlu0 %238
        %v240 = vlaneseq
        %v241 = vshrl.u32 %v240, 7
        %v242 = vsub.s32 4, %v241
        %v243 = vrot.slane %v204, %v242
        %245 = vbcast.lane.b32.xlu0 %v243, 256
        %v246 = vpop.permute.xlu0 %245
        %v247 = vlaneseq
        %v248 = vshrl.u32 %v247, 7
        %v249 = vsub.s32 5, %v248
        %v250 = vrot.slane %v204, %v249
        %252 = vbcast.lane.b32.xlu0 %v250, 256
        %v253 = vpop.permute.xlu0 %252
        %v254 = vlaneseq
        %v255 = vshrl.u32 %v254, 7
        %v256 = vsub.s32 6, %v255
        %v257 = vrot.slane %v204, %v256
        %259 = vbcast.lane.b32.xlu0 %v257, 256
        %v260 = vpop.permute.xlu0 %259
        %v261 = vlaneseq
        %v262 = vshrl.u32 %v261, 7
        %v263 = vsub.s32 7, %v262
        %v264 = vrot.slane %v204, %v263
        %266 = vbcast.lane.b32.xlu0 %v264, 256
        %v267 = vpop.permute.xlu0 %266
        %vm268 = vcmp.eq.s32.totalorder %v218, %v210
        %vm269 = vcmp.eq.s32.totalorder %v218, %v211
        %vm270 = vcmp.eq.s32.totalorder %v225, %v210
        %vm271 = vcmp.eq.s32.totalorder %v225, %v211
        %vm272 = vcmp.eq.s32.totalorder %v232, %v210
        %vm273 = vcmp.eq.s32.totalorder %v232, %v211
        %vm274 = vcmp.eq.s32.totalorder %v239, %v210
        %vm275 = vcmp.eq.s32.totalorder %v239, %v211
        %vm276 = vcmp.eq.s32.totalorder %v246, %v210
        %vm277 = vcmp.eq.s32.totalorder %v246, %v211
        %vm278 = vcmp.eq.s32.totalorder %v253, %v210
        %vm279 = vcmp.eq.s32.totalorder %v253, %v211
        %vm280 = vcmp.eq.s32.totalorder %v260, %v210
        %vm281 = vcmp.eq.s32.totalorder %v260, %v211
        %vm282 = vcmp.eq.s32.totalorder %v267, %v210
        %vm283 = vcmp.eq.s32.totalorder %v267, %v211
        %v284 = vsel %vm268, 1, 0
        %v285 = vsel %vm269, 1, 0
        %v286 = vsel %vm270, 1, 0
        %v287 = vsel %vm271, 1, 0
        %v288 = vsel %vm272, 1, 0
        %v289 = vsel %vm273, 1, 0
        %v290 = vsel %vm274, 1, 0
        %v291 = vsel %vm275, 1, 0
        %v292 = vsel %vm276, 1, 0
        %v293 = vsel %vm277, 1, 0
        %v294 = vsel %vm278, 1, 0
        %v295 = vsel %vm279, 1, 0
        %v296 = vsel %vm280, 1, 0
        %v297 = vsel %vm281, 1, 0
        %v298 = vsel %vm282, 1, 0
        %v299 = vsel %vm283, 1, 0
        %v300 = vcvt.s32.f32 %v284
        %v301 = vcvt.s32.f32 %v285
        %v302 = vcvt.s32.f32 %v286
        %v303 = vcvt.s32.f32 %v287
        %v304 = vcvt.s32.f32 %v288
        %v305 = vcvt.s32.f32 %v289
        %v306 = vcvt.s32.f32 %v290
        %v307 = vcvt.s32.f32 %v291
        %v308 = vcvt.s32.f32 %v292
        %v309 = vcvt.s32.f32 %v293
        %v310 = vcvt.s32.f32 %v294
        %v311 = vcvt.s32.f32 %v295
        %v312 = vcvt.s32.f32 %v296
        %v313 = vcvt.s32.f32 %v297
        %v314 = vcvt.s32.f32 %v298
        %v315 = vcvt.s32.f32 %v299
        %v316 = vrot.slane %v300, 4
        %v317 = vadd.f32 %v300, %v316
        %v318 = vrot.slane %v317, 2
        %v319 = vadd.f32 %v317, %v318
        %v320 = vrot.slane %v319, 1
        %v321 = vadd.f32 %v319, %v320
        %v322 = vrot.slane %v301, 4
        %v323 = vadd.f32 %v301, %v322
        %v324 = vrot.slane %v323, 2
        %v325 = vadd.f32 %v323, %v324
        %v326 = vrot.slane %v325, 1
        %v327 = vadd.f32 %v325, %v326
        %v328 = vrot.slane %v302, 4
        %v329 = vadd.f32 %v302, %v328
        %v330 = vrot.slane %v329, 2
        %v331 = vadd.f32 %v329, %v330
        %v332 = vrot.slane %v331, 1
        %v333 = vadd.f32 %v331, %v332
        %v334 = vrot.slane %v303, 4
        %v335 = vadd.f32 %v303, %v334
        %v336 = vrot.slane %v335, 2
        %v337 = vadd.f32 %v335, %v336
        %v338 = vrot.slane %v337, 1
        %v339 = vadd.f32 %v337, %v338
        %v340 = vrot.slane %v304, 4
        %v341 = vadd.f32 %v304, %v340
        %v342 = vrot.slane %v341, 2
        %v343 = vadd.f32 %v341, %v342
        %v344 = vrot.slane %v343, 1
        %v345 = vadd.f32 %v343, %v344
        %v346 = vrot.slane %v305, 4
        %v347 = vadd.f32 %v305, %v346
        %v348 = vrot.slane %v347, 2
        %v349 = vadd.f32 %v347, %v348
        %v350 = vrot.slane %v349, 1
        %v351 = vadd.f32 %v349, %v350
        %v352 = vrot.slane %v306, 4
        %v353 = vadd.f32 %v306, %v352
        %v354 = vrot.slane %v353, 2
        %v355 = vadd.f32 %v353, %v354
        %v356 = vrot.slane %v355, 1
        %v357 = vadd.f32 %v355, %v356
        %v358 = vrot.slane %v307, 4
        %v359 = vadd.f32 %v307, %v358
        %v360 = vrot.slane %v359, 2
        %v361 = vadd.f32 %v359, %v360
        %v362 = vrot.slane %v361, 1
        %v363 = vadd.f32 %v361, %v362
        %v364 = vrot.slane %v308, 4
        %v365 = vadd.f32 %v308, %v364
        %v366 = vrot.slane %v365, 2
        %v367 = vadd.f32 %v365, %v366
        %v368 = vrot.slane %v367, 1
        %v369 = vadd.f32 %v367, %v368
        %v370 = vrot.slane %v309, 4
        %v371 = vadd.f32 %v309, %v370
        %v372 = vrot.slane %v371, 2
        %v373 = vadd.f32 %v371, %v372
        %v374 = vrot.slane %v373, 1
        %v375 = vadd.f32 %v373, %v374
        %v376 = vrot.slane %v310, 4
        %v377 = vadd.f32 %v310, %v376
        %v378 = vrot.slane %v377, 2
        %v379 = vadd.f32 %v377, %v378
        %v380 = vrot.slane %v379, 1
        %v381 = vadd.f32 %v379, %v380
        %v382 = vrot.slane %v311, 4
        %v383 = vadd.f32 %v311, %v382
        %v384 = vrot.slane %v383, 2
        %v385 = vadd.f32 %v383, %v384
        %v386 = vrot.slane %v385, 1
        %v387 = vadd.f32 %v385, %v386
        %v388 = vrot.slane %v312, 4
        %v389 = vadd.f32 %v312, %v388
        %v390 = vrot.slane %v389, 2
        %v391 = vadd.f32 %v389, %v390
        %v392 = vrot.slane %v391, 1
        %v393 = vadd.f32 %v391, %v392
        %v394 = vrot.slane %v313, 4
        %v395 = vadd.f32 %v313, %v394
        %v396 = vrot.slane %v395, 2
        %v397 = vadd.f32 %v395, %v396
        %v398 = vrot.slane %v397, 1
        %v399 = vadd.f32 %v397, %v398
        %v400 = vrot.slane %v314, 4
        %v401 = vadd.f32 %v314, %v400
        %v402 = vrot.slane %v401, 2
        %v403 = vadd.f32 %v401, %v402
        %v404 = vrot.slane %v403, 1
        %v405 = vadd.f32 %v403, %v404
        %v406 = vrot.slane %v315, 4
        %v407 = vadd.f32 %v315, %v406
        %v408 = vrot.slane %v407, 2
        %v409 = vadd.f32 %v407, %v408
        %v410 = vrot.slane %v409, 1
        %v411 = vadd.f32 %v409, %v410
        %v412 = vld [vmem:[#allocation2] sm:$0xff]
        %v413 = vld [vmem:[#allocation2 + $0x8] sm:$0xff]
        %v414 = vld [vmem:[#allocation2 + $0x10] sm:$0xff]
        %v415 = vld [vmem:[%s194] sm:$0xff]
        %v416 = vld [vmem:[%s194 + $0x8] sm:$0xff]
        %v417 = vld [vmem:[%s194 + $0x10] sm:$0xff]
        %v418 = vld [vmem:[%s194 + $0x18] sm:$0xff]
        %v419 = vld [vmem:[%s194 + $0x20] sm:$0xff]
        %v420 = vld [vmem:[%s194 + $0x28] sm:$0xff]
        %v421 = vld [vmem:[%s194 + $0x30] sm:$0xff]
        %v422 = vld [vmem:[%s194 + $0x38] sm:$0xff]
        %v423 = vld [vmem:[%s194 + $0x40] sm:$0xff]
        %v424 = vld [vmem:[%s194 + $0x48] sm:$0xff]
        %v425 = vld [vmem:[%s194 + $0x50] sm:$0xff]
        %v426 = vld [vmem:[%s194 + $0x58] sm:$0xff]
        %v427 = vld [vmem:[%s194 + $0x60] sm:$0xff]
        %v428 = vld [vmem:[%s194 + $0x68] sm:$0xff]
        %v429 = vld [vmem:[%s194 + $0x70] sm:$0xff]
        %v430 = vld [vmem:[%s194 + $0x78] sm:$0xff]
        %v431 = vld [vmem:[%s194 + $0x80] sm:$0xff]
        %v432 = vld [vmem:[%s194 + $0x88] sm:$0xff]
        %v433 = vld [vmem:[%s194 + $0x90] sm:$0xff]
        %v434 = vld [vmem:[%s194 + $0x98] sm:$0xff]
        %v435 = vld [vmem:[%s194 + $0xa0] sm:$0xff]
        %v436 = vld [vmem:[%s194 + $0xa8] sm:$0xff]
        %v437 = vld [vmem:[%s194 + $0xb0] sm:$0xff]
        %v438 = vld [vmem:[%s194 + $0xb8] sm:$0xff]
        %v439 = vld [vmem:[%s194 + $0xc0] sm:$0xff]
        %v440 = vld [vmem:[%s194 + $0xc8] sm:$0xff]
        %v441 = vld [vmem:[%s194 + $0xd0] sm:$0xff]
        %v442 = vld [vmem:[%s194 + $0xd8] sm:$0xff]
        %v443 = vld [vmem:[%s194 + $0xe0] sm:$0xff]
        %v444 = vld [vmem:[%s194 + $0xe8] sm:$0xff]
        %v445 = vld [vmem:[%s194 + $0xf0] sm:$0xff]
        %v446 = vld [vmem:[%s194 + $0xf8] sm:$0xff]
        %v447 = vld [vmem:[%s194 + $0x100] sm:$0xff]
        %v448 = vld [vmem:[%s194 + $0x108] sm:$0xff]
        %v449 = vld [vmem:[%s194 + $0x110] sm:$0xff]
        %v450 = vld [vmem:[%s194 + $0x118] sm:$0xff]
        %v451 = vld [vmem:[%s194 + $0x120] sm:$0xff]
        %v452 = vld [vmem:[%s194 + $0x128] sm:$0xff]
        %v453 = vld [vmem:[%s194 + $0x130] sm:$0xff]
        %v454 = vld [vmem:[%s194 + $0x138] sm:$0xff]
        %v455 = vld [vmem:[%s194 + $0x140] sm:$0xff]
        %v456 = vld [vmem:[%s194 + $0x148] sm:$0xff]
        %v457 = vld [vmem:[%s194 + $0x150] sm:$0xff]
        %v458 = vld [vmem:[%s194 + $0x158] sm:$0xff]
        %v459 = vld [vmem:[%s194 + $0x160] sm:$0xff]
        %v460 = vld [vmem:[%s194 + $0x168] sm:$0xff]
        %v461 = vld [vmem:[%s194 + $0x170] sm:$0xff]
        %v462 = vld [vmem:[%s194 + $0x178] sm:$0xff]
        %v463 = vld [vmem:[%s194 + $0x180] sm:$0xff]
        %v464 = vld [vmem:[%s194 + $0x188] sm:$0xff]
        %v465 = vld [vmem:[%s194 + $0x190] sm:$0xff]
        %v466 = vld [vmem:[%s194 + $0x198] sm:$0xff]
        %v467 = vld [vmem:[%s194 + $0x1a0] sm:$0xff]
        %v468 = vld [vmem:[%s194 + $0x1a8] sm:$0xff]
        %v469 = vld [vmem:[%s194 + $0x1b0] sm:$0xff]
        %v470 = vld [vmem:[%s194 + $0x1b8] sm:$0xff]
        %v471 = vld [vmem:[%s194 + $0x1c0] sm:$0xff]
        %v472 = vld [vmem:[%s194 + $0x1c8] sm:$0xff]
        %v473 = vld [vmem:[%s194 + $0x1d0] sm:$0xff]
        %v474 = vld [vmem:[%s194 + $0x1d8] sm:$0xff]
        %v475 = vld [vmem:[%s194 + $0x1e0] sm:$0xff]
        %v476 = vld [vmem:[%s194 + $0x1e8] sm:$0xff]
        %v477 = vld [vmem:[%s194 + $0x1f0] sm:$0xff]
        %v478 = vld [vmem:[%s194 + $0x1f8] sm:$0xff]
        %v479 = vld [vmem:[%s194 + $0x200] sm:$0xff]
        %v480 = vld [vmem:[%s194 + $0x208] sm:$0xff]
        %v481 = vld [vmem:[%s194 + $0x210] sm:$0xff]
        %v482 = vld [vmem:[%s194 + $0x218] sm:$0xff]
        %v483 = vld [vmem:[%s194 + $0x220] sm:$0xff]
        %v484 = vld [vmem:[%s194 + $0x228] sm:$0xff]
        %v485 = vld [vmem:[%s194 + $0x230] sm:$0xff]
        %v486 = vld [vmem:[%s194 + $0x238] sm:$0xff]
        %v487 = vld [vmem:[%s194 + $0x240] sm:$0xff]
        %v488 = vld [vmem:[%s194 + $0x248] sm:$0xff]
        %v489 = vld [vmem:[%s194 + $0x250] sm:$0xff]
        %v490 = vld [vmem:[%s194 + $0x258] sm:$0xff]
        %v491 = vld [vmem:[%s194 + $0x260] sm:$0xff]
        %v492 = vld [vmem:[%s194 + $0x268] sm:$0xff]
        %v493 = vld [vmem:[%s194 + $0x270] sm:$0xff]
        %v494 = vld [vmem:[%s194 + $0x278] sm:$0xff]
        %v495 = vld [vmem:[%s194 + $0x280] sm:$0xff]
        %v496 = vld [vmem:[%s194 + $0x288] sm:$0xff]
        %v497 = vld [vmem:[%s194 + $0x290] sm:$0xff]
        %v498 = vld [vmem:[%s194 + $0x298] sm:$0xff]
        %v499 = vld [vmem:[%s194 + $0x2a0] sm:$0xff]
        %v500 = vld [vmem:[%s194 + $0x2a8] sm:$0xff]
        %v501 = vld [vmem:[%s194 + $0x2b0] sm:$0xff]
        %v502 = vld [vmem:[%s194 + $0x2b8] sm:$0xff]
        %v503 = vld [vmem:[%s194 + $0x2c0] sm:$0xff]
        %v504 = vld [vmem:[%s194 + $0x2c8] sm:$0xff]
        %v505 = vld [vmem:[%s194 + $0x2d0] sm:$0xff]
        %v506 = vld [vmem:[%s194 + $0x2d8] sm:$0xff]
        %v507 = vld [vmem:[%s194 + $0x2e0] sm:$0xff]
        %v508 = vld [vmem:[%s194 + $0x2e8] sm:$0xff]
        %v509 = vld [vmem:[%s194 + $0x2f0] sm:$0xff]
        %v510 = vld [vmem:[%s194 + $0x2f8] sm:$0xff]
        %vm527 = vcmask 1041409
        %v528 = vsel %vm527, %v333, %v321
        %vm529 = vcmask 1042434
        %v530 = vsel %vm529, %v345, %v528
        %vm531 = vcmask 1043459
        %v532 = vsel %vm531, %v357, %v530
        %vm533 = vcmask 1044484
        %v534 = vsel %vm533, %v369, %v532
        %vm535 = vcmask 1045509
        %v536 = vsel %vm535, %v381, %v534
        %vm537 = vcmask 1046534
        %v538 = vsel %vm537, %v393, %v536
        %vm539 = vcmask 1047559
        %v540 = vsel %vm539, %v405, %v538
        %v541 = vsel %vm527, %v339, %v327
        %v542 = vsel %vm529, %v351, %v541
        %v543 = vsel %vm531, %v363, %v542
        %v544 = vsel %vm533, %v375, %v543
        %v545 = vsel %vm535, %v387, %v544
        %v546 = vsel %vm537, %v399, %v545
        %v547 = vsel %vm539, %v411, %v546
        %550 = vmatprep.subr.mxu0 %v461
        %551 = vmatpush1.msra.mxu0 %v460
        %552 = vmatprep.subr.mxu0 %v458
        %553 = vmatpush1.msra.mxu0 %v457
        %554 = vmatprep.subr.mxu0 %v455
        %555 = vmatpush1.msra.mxu0 %v454
        %556 = vmatprep.subr.mxu0 %v452
        %557 = vmatpush1.msra.mxu0 %v451
        %558 = vmatprep.subr.mxu0 %v449
        %559 = vmatpush1.msra.mxu0 %v448
        %560 = vmatprep.subr.mxu0 %v446
        %561 = vmatpush1.msra.mxu0 %v445
        %562 = vmatprep.subr.mxu0 %v443
        %563 = vmatpush1.msra.mxu0 %v442
        %564 = vmatprep.subr.mxu0 %v440
        %565 = vmatpush1.msra.mxu0 %v439
        %566 = vmatprep.subr.mxu0 %v437
        %567 = vmatpush1.msra.mxu0 %v436
        %568 = vmatprep.subr.mxu0 %v434
        %569 = vmatpush1.msra.mxu0 %v433
        %570 = vmatprep.subr.mxu0 %v431
        %571 = vmatpush1.msra.mxu0 %v430
        %572 = vmatprep.subr.mxu0 %v428
        %573 = vmatpush1.msra.mxu0 %v427
        %574 = vmatprep.subr.mxu0 %v425
        %575 = vmatpush1.msra.mxu0 %v424
        %576 = vmatprep.subr.mxu0 %v422
        %577 = vmatpush1.msra.mxu0 %v421
        %578 = vmatprep.subr.mxu0 %v419
        %579 = vmatpush1.msra.mxu0 %v418
        %580 = vmatprep.subr.mxu0 %v416
        %581 = vmatpush1.msra.mxu0 %v415
        %582 = vmatprep.subr.mxu0 %v509
        %583 = vmatpush2.msra.mxu0 %v508
        %584 = vmatprep.subr.mxu0 %v506
        %585 = vmatpush2.msra.mxu0 %v505
        %586 = vmatprep.subr.mxu0 %v503
        %587 = vmatpush2.msra.mxu0 %v502
        %588 = vmatprep.subr.mxu0 %v500
        %589 = vmatpush2.msra.mxu0 %v499
        %590 = vmatprep.subr.mxu0 %v497
        %591 = vmatpush2.msra.mxu0 %v496
        %592 = vmatprep.subr.mxu0 %v494
        %593 = vmatpush2.msra.mxu0 %v493
        %594 = vmatprep.subr.mxu0 %v491
        %595 = vmatpush2.msra.mxu0 %v490
        %596 = vmatprep.subr.mxu0 %v488
        %597 = vmatpush2.msra.mxu0 %v487
        %598 = vmatprep.subr.mxu0 %v485
        %599 = vmatpush2.msra.mxu0 %v484
        %600 = vmatprep.subr.mxu0 %v482
        %601 = vmatpush2.msra.mxu0 %v481
        %602 = vmatprep.subr.mxu0 %v479
        %603 = vmatpush2.msra.mxu0 %v478
        %604 = vmatprep.subr.mxu0 %v476
        %605 = vmatpush2.msra.mxu0 %v475
        %606 = vmatprep.subr.mxu0 %v473
        %607 = vmatpush2.msra.mxu0 %v472
        %608 = vmatprep.subr.mxu0 %v470
        %609 = vmatpush2.msra.mxu0 %v469
        %610 = vmatprep.subr.mxu0 %v467
        %611 = vmatpush2.msra.mxu0 %v466
        %612 = vmatprep.subr.mxu0 %v464
        %613 = vmatpush2.msra.mxu0 %v463
        %614 = vmatprep.mubr.f32.mxu0 %v547
        %615 = vmatmul.mubr.f32.gmra.mxu0 %v540
        %v616 = vpop.f32.mrf.mxu0
        %v617 = vadd.f32 0.0, %v616
        %v618 = vpop.f32.mrf.mxu0
        %v619 = vadd.f32 0.0, %v618
        %620 = vdwg.mxu0
        %621 = vmatprep.subr.mxu0 0.0
        %622 = vmatpush1.msra.mxu0 %v462
        %623 = vmatprep.subr.mxu0 0.0
        %624 = vmatpush1.msra.mxu0 %v459
        %625 = vmatprep.subr.mxu0 0.0
        %626 = vmatpush1.msra.mxu0 %v456
        %627 = vmatprep.subr.mxu0 0.0
        %628 = vmatpush1.msra.mxu0 %v453
        %629 = vmatprep.subr.mxu0 0.0
        %630 = vmatpush1.msra.mxu0 %v450
        %631 = vmatprep.subr.mxu0 0.0
        %632 = vmatpush1.msra.mxu0 %v447
        %633 = vmatprep.subr.mxu0 0.0
        %634 = vmatpush1.msra.mxu0 %v444
        %635 = vmatprep.subr.mxu0 0.0
        %636 = vmatpush1.msra.mxu0 %v441
        %637 = vmatprep.subr.mxu0 0.0
        %638 = vmatpush1.msra.mxu0 %v438
        %639 = vmatprep.subr.mxu0 0.0
        %640 = vmatpush1.msra.mxu0 %v435
        %641 = vmatprep.subr.mxu0 0.0
        %642 = vmatpush1.msra.mxu0 %v432
        %643 = vmatprep.subr.mxu0 0.0
        %644 = vmatpush1.msra.mxu0 %v429
        %645 = vmatprep.subr.mxu0 0.0
        %646 = vmatpush1.msra.mxu0 %v426
        %647 = vmatprep.subr.mxu0 0.0
        %648 = vmatpush1.msra.mxu0 %v423
        %649 = vmatprep.subr.mxu0 0.0
        %650 = vmatpush1.msra.mxu0 %v420
        %651 = vmatprep.subr.mxu0 0.0
        %652 = vmatpush1.msra.mxu0 %v417
        %653 = vmatprep.subr.mxu0 0.0
        %654 = vmatpush2.msra.mxu0 %v510
        %655 = vmatprep.subr.mxu0 0.0
        %656 = vmatpush2.msra.mxu0 %v507
        %657 = vmatprep.subr.mxu0 0.0
        %658 = vmatpush2.msra.mxu0 %v504
        %659 = vmatprep.subr.mxu0 0.0
        %660 = vmatpush2.msra.mxu0 %v501
        %661 = vmatprep.subr.mxu0 0.0
        %662 = vmatpush2.msra.mxu0 %v498
        %663 = vmatprep.subr.mxu0 0.0
        %664 = vmatpush2.msra.mxu0 %v495
        %665 = vmatprep.subr.mxu0 0.0
        %666 = vmatpush2.msra.mxu0 %v492
        %667 = vmatprep.subr.mxu0 0.0
        %668 = vmatpush2.msra.mxu0 %v489
        %669 = vmatprep.subr.mxu0 0.0
        %670 = vmatpush2.msra.mxu0 %v486
        %671 = vmatprep.subr.mxu0 0.0
        %672 = vmatpush2.msra.mxu0 %v483
        %673 = vmatprep.subr.mxu0 0.0
        %674 = vmatpush2.msra.mxu0 %v480
        %675 = vmatprep.subr.mxu0 0.0
        %676 = vmatpush2.msra.mxu0 %v477
        %677 = vmatprep.subr.mxu0 0.0
        %678 = vmatpush2.msra.mxu0 %v474
        %679 = vmatprep.subr.mxu0 0.0
        %680 = vmatpush2.msra.mxu0 %v471
        %681 = vmatprep.subr.mxu0 0.0
        %682 = vmatpush2.msra.mxu0 %v468
        %683 = vmatprep.subr.mxu0 0.0
        %684 = vmatpush2.msra.mxu0 %v465
        %685 = vmatprep.mubr.f32.mxu0 %v547
        %686 = vmatmul.mubr.f32.gmra.mxu0 %v540
        %v687 = vpop.f32.mrf.mxu0
        %v688 = vadd.f32 0.0, %v687
        %v689 = vpop.f32.mrf.mxu0
        %690 = vdwg.mxu0
        %v691 = vadd.f32 %v412, %v617
        %v692 = vadd.f32 %v413, %v619
        %v693 = vadd.f32 %v414, %v688
        %694 = vst [vmem:[#allocation2] sm:$0xff] %v691
        %695 = vst [vmem:[#allocation2 + $0x8] sm:$0xff] %v692
        %vm696 = vcmask 359424
        %697 = vst.msk [vmem:[#allocation2 + $0x10] sm:$0xff] %vm696, %v693
        %p698 = scmp.eq.s32.totalorder %s20, 3
        // Predicated region
        $region37: #{tpu_custom_call.1} parent=31 // pred_check
          %p699 = pneg %p698
        $region38: #{tpu_custom_call.1} parent=31 // pred_check_branch
          %701 = sbr.rel (%p699) target = $region40
        $region39: #{tpu_custom_call.1} parent=31 // pred_region
          %v702 = vld [vmem:[#allocation2] sm:$0xff]
          %v703 = vld [vmem:[#allocation2 + $0x8] sm:$0xff]
          %v704 = vld [vmem:[#allocation2 + $0x10] sm:$0xff]
          %v705 = vmul.f32 %v702, 0.125
          %v706 = vmul.f32 %v703, 0.125
          %v707 = vmul.f32 %v704, 0.125
          %v708 = vld [vmem:[%s2] sm:$0xff]
          %v709 = vld [vmem:[%s2 + $0x8] sm:$0xff]
          %v710 = vld [vmem:[%s2 + $0x10] sm:$0xff]
          %v711 = vld [vmem:[%s2 + $0x18] sm:$0xff]
          %v712 = vld [vmem:[%s2 + $0x20] sm:$0xff]
          %v713 = vld [vmem:[%s2 + $0x28] sm:$0xff]
          %v714 = vld [vmem:[%s2 + $0x30] sm:$0xff]
          %v715 = vld [vmem:[%s2 + $0x38] sm:$0xff]
          %v716 = vld [vmem:[%s2 + $0x40] sm:$0xff]
          %v717 = vld [vmem:[%s2 + $0x48] sm:$0xff]
          %v718 = vld [vmem:[%s2 + $0x50] sm:$0xff]
          %v719 = vld [vmem:[%s2 + $0x58] sm:$0xff]
          %v720 = vld [vmem:[%s2 + $0x60] sm:$0xff]
          %v721 = vld [vmem:[%s2 + $0x68] sm:$0xff]
          %v722 = vld [vmem:[%s2 + $0x70] sm:$0xff]
          %v723 = vld [vmem:[%s2 + $0x78] sm:$0xff]
          %v724 = vld [vmem:[%s2 + $0x80] sm:$0xff]
          %v725 = vld [vmem:[%s2 + $0x88] sm:$0xff]
          %v726 = vld [vmem:[%s2 + $0x90] sm:$0xff]
          %v727 = vld [vmem:[%s2 + $0x98] sm:$0xff]
          %v728 = vld [vmem:[%s2 + $0xa0] sm:$0xff]
          %v729 = vld [vmem:[%s2 + $0xa8] sm:$0xff]
          %v730 = vld [vmem:[%s2 + $0xb0] sm:$0xff]
          %v731 = vld [vmem:[%s2 + $0xb8] sm:$0xff]
          %v732 = vld [vmem:[%s2 + $0xc0] sm:$0xff]
          %v733 = vld [vmem:[%s2 + $0xc8] sm:$0xff]
          %v734 = vld [vmem:[%s2 + $0xd0] sm:$0xff]
          %v735 = vld [vmem:[%s2 + $0xd8] sm:$0xff]
          %v736 = vld [vmem:[%s2 + $0xe0] sm:$0xff]
          %v737 = vld [vmem:[%s2 + $0xe8] sm:$0xff]
          %v738 = vld [vmem:[%s2 + $0xf0] sm:$0xff]
          %v739 = vld [vmem:[%s2 + $0xf8] sm:$0xff]
          %v740 = vld [vmem:[%s2 + $0x100] sm:$0xff]
          %v741 = vld [vmem:[%s2 + $0x108] sm:$0xff]
          %v742 = vld [vmem:[%s2 + $0x110] sm:$0xff]
          %v743 = vld [vmem:[%s2 + $0x118] sm:$0xff]
          %v744 = vld [vmem:[%s2 + $0x120] sm:$0xff]
          %v745 = vld [vmem:[%s2 + $0x128] sm:$0xf]
          %v747 = vsel %vm696, %v707, 0
          %vm749 = vcmask 1043456
          %v751 = vsel %vm749, %v745, 0
          %753 = vmatprep.subr.mxu0 0.0
          %754 = vmatpush1.msra.mxu0 %v723
          %755 = vmatprep.subr.mxu0 0.0
          %756 = vmatpush1.msra.mxu0 %v722
          %757 = vmatprep.subr.mxu0 0.0
          %758 = vmatpush1.msra.mxu0 %v721
          %759 = vmatprep.subr.mxu0 0.0
          %760 = vmatpush1.msra.mxu0 %v720
          %761 = vmatprep.subr.mxu0 0.0
          %762 = vmatpush1.msra.mxu0 %v719
          %763 = vmatprep.subr.mxu0 0.0
          %764 = vmatpush1.msra.mxu0 %v718
          %765 = vmatprep.subr.mxu0 0.0
          %766 = vmatpush1.msra.mxu0 %v717
          %767 = vmatprep.subr.mxu0 0.0
          %768 = vmatpush1.msra.mxu0 %v716
          %769 = vmatprep.subr.mxu0 0.0
          %770 = vmatpush1.msra.mxu0 %v715
          %771 = vmatprep.subr.mxu0 0.0
          %772 = vmatpush1.msra.mxu0 %v714
          %773 = vmatprep.subr.mxu0 0.0
          %774 = vmatpush1.msra.mxu0 %v713
          %775 = vmatprep.subr.mxu0 0.0
          %776 = vmatpush1.msra.mxu0 %v712
          %777 = vmatprep.subr.mxu0 0.0
          %778 = vmatpush1.msra.mxu0 %v711
          %779 = vmatprep.subr.mxu0 0.0
          %780 = vmatpush1.msra.mxu0 %v710
          %781 = vmatprep.subr.mxu0 0.0
          %782 = vmatpush1.msra.mxu0 %v709
          %783 = vmatprep.subr.mxu0 0.0
          %784 = vmatpush1.msra.mxu0 %v708
          %785 = vmatprep.subr.mxu0 0.0
          %786 = vmatpush2.msra.mxu0 %v739
          %787 = vmatprep.subr.mxu0 0.0
          %788 = vmatpush2.msra.mxu0 %v738
          %789 = vmatprep.subr.mxu0 0.0
          %790 = vmatpush2.msra.mxu0 %v737
          %791 = vmatprep.subr.mxu0 0.0
          %792 = vmatpush2.msra.mxu0 %v736
          %793 = vmatprep.subr.mxu0 0.0
          %794 = vmatpush2.msra.mxu0 %v735
          %795 = vmatprep.subr.mxu0 0.0
          %796 = vmatpush2.msra.mxu0 %v734
          %797 = vmatprep.subr.mxu0 0.0
          %798 = vmatpush2.msra.mxu0 %v733
          %799 = vmatprep.subr.mxu0 0.0
          %800 = vmatpush2.msra.mxu0 %v732
          %801 = vmatprep.subr.mxu0 0.0
          %802 = vmatpush2.msra.mxu0 %v731
          %803 = vmatprep.subr.mxu0 0.0
          %804 = vmatpush2.msra.mxu0 %v730
          %805 = vmatprep.subr.mxu0 0.0
          %806 = vmatpush2.msra.mxu0 %v729
          %807 = vmatprep.subr.mxu0 0.0
          %808 = vmatpush2.msra.mxu0 %v728
          %809 = vmatprep.subr.mxu0 0.0
          %810 = vmatpush2.msra.mxu0 %v727
          %811 = vmatprep.subr.mxu0 0.0
          %812 = vmatpush2.msra.mxu0 %v726
          %813 = vmatprep.subr.mxu0 0.0
          %814 = vmatpush2.msra.mxu0 %v725
          %815 = vmatprep.subr.mxu0 0.0
          %816 = vmatpush2.msra.mxu0 %v724
          %817 = vmatprep.mubr.f32.mxu0 %v706
          %818 = vmatmul.mubr.f32.gmra.mxu0 %v705
          %v819 = vpop.f32.mrf.mxu0
          %v820 = vadd.f32 0.0, %v819
          %v821 = vpop.f32.mrf.mxu0
          %822 = vdwg.mxu0
          %823 = vmatprep.subr.mxu0 0.0
          %824 = vmatpush1.msra.mxu0 0.0
          %825 = vmatprep.subr.mxu0 0.0
          %826 = vmatpush1.msra.mxu0 0.0
          %827 = vmatprep.subr.mxu0 0.0
          %828 = vmatpush1.msra.mxu0 0.0
          %829 = vmatprep.subr.mxu0 0.0
          %830 = vmatpush1.msra.mxu0 0.0
          %831 = vmatprep.subr.mxu0 0.0
          %832 = vmatpush1.msra.mxu0 0.0
          %833 = vmatprep.subr.mxu0 0.0
          %834 = vmatpush1.msra.mxu0 0.0
          %835 = vmatprep.subr.mxu0 0.0
          %836 = vmatpush1.msra.mxu0 0.0
          %837 = vmatprep.subr.mxu0 0.0
          %838 = vmatpush1.msra.mxu0 0.0
          %839 = vmatprep.subr.mxu0 0.0
          %840 = vmatpush1.msra.mxu0 0.0
          %841 = vmatprep.subr.mxu0 0.0
          %842 = vmatpush1.msra.mxu0 0.0
          %843 = vmatprep.subr.mxu0 0.0
          %844 = vmatpush1.msra.mxu0 %v751
          %845 = vmatprep.subr.mxu0 0.0
          %846 = vmatpush1.msra.mxu0 %v744
          %847 = vmatprep.subr.mxu0 0.0
          %848 = vmatpush1.msra.mxu0 %v743
          %849 = vmatprep.subr.mxu0 0.0
          %850 = vmatpush1.msra.mxu0 %v742
          %851 = vmatprep.subr.mxu0 0.0
          %852 = vmatpush1.msra.mxu0 %v741
          %853 = vmatprep.subr.mxu0 0.0
          %854 = vmatpush1.msra.mxu0 %v740
          %855 = vmatprep.subr.mxu0 0.0
          %856 = vmatpush2.msra.mxu0 0.0
          %857 = vmatprep.subr.mxu0 0.0
          %858 = vmatpush2.msra.mxu0 0.0
          %859 = vmatprep.subr.mxu0 0.0
          %860 = vmatpush2.msra.mxu0 0.0
          %861 = vmatprep.subr.mxu0 0.0
          %862 = vmatpush2.msra.mxu0 0.0
          %863 = vmatprep.subr.mxu0 0.0
          %864 = vmatpush2.msra.mxu0 0.0
          %865 = vmatprep.subr.mxu0 0.0
          %866 = vmatpush2.msra.mxu0 0.0
          %867 = vmatprep.subr.mxu0 0.0
          %868 = vmatpush2.msra.mxu0 0.0
          %869 = vmatprep.subr.mxu0 0.0
          %870 = vmatpush2.msra.mxu0 0.0
          %871 = vmatprep.subr.mxu0 0.0
          %872 = vmatpush2.msra.mxu0 0.0
          %873 = vmatprep.subr.mxu0 0.0
          %874 = vmatpush2.msra.mxu0 0.0
          %875 = vmatprep.subr.mxu0 0.0
          %876 = vmatpush2.msra.mxu0 0.0
          %877 = vmatprep.subr.mxu0 0.0
          %878 = vmatpush2.msra.mxu0 0.0
          %879 = vmatprep.subr.mxu0 0.0
          %880 = vmatpush2.msra.mxu0 0.0
          %881 = vmatprep.subr.mxu0 0.0
          %882 = vmatpush2.msra.mxu0 0.0
          %883 = vmatprep.subr.mxu0 0.0
          %884 = vmatpush2.msra.mxu0 0.0
          %885 = vmatprep.subr.mxu0 0.0
          %886 = vmatpush2.msra.mxu0 0.0
          %887 = vmatprep.mubr.f32.mxu0 0.0
          %888 = vmatmul.mubr.f32.gmra.mxu0 %v747
          %v889 = vpop.f32.mrf.mxu0
          %v890 = vadd.f32 %v820, %v889
          %v891 = vpop.f32.mrf.mxu0
          %892 = vdwg.mxu0
          %893 = vst [vmem:[#allocation3] sm:$0xff] %v890
        $region40: #{tpu_custom_call.1} parent=31 // pred_fallthru
          _
        // Predicated region
        $region41: #{tpu_custom_call.1} parent=31 // pred_check
          %p894 = pneg %p118
        $region42: #{tpu_custom_call.1} parent=31 // pred_check_branch
          %896 = sbr.rel (%p894) target = $region44
        $region43: #{tpu_custom_call.1} parent=31 // pred_region
          %s898 = ssub.s32 128, 128
          %899 = vsyncadd [#allocation4], %s898
          %s900 = smul.addr %s19, 128
          %s901 = scalar_lea.hbm %s3, %s900
          %s903 = sshll.u32 [#allocation3], 4
          %s904 = int_to_ptr.vmem [resolvable:$true] %s903
          %906 = dma.vmem_to_hbm [thread:$0]  %s904, 128, %s901, [#allocation4]
        $region44: #{tpu_custom_call.1} parent=31 // pred_fallthru
          _
        // Predicated region
        $region45: #{tpu_custom_call.1} parent=31 // pred_check
          %p907 = pneg %p118
        $region46: #{tpu_custom_call.1} parent=31 // pred_check_branch
          %909 = sbr.rel (%p907) target = $region48
        $region47: #{tpu_custom_call.1} parent=31 // pred_region
          %910 = dma.done [#allocation4], 128
        $region48: #{tpu_custom_call.1} parent=31 // pred_fallthru
          _
      $region32: #{tpu_custom_call.1} parent=5 // pred_fallthru
        _
      %p911 = scmp.le.s32.totalorder 2, %s10
      // Predicated region
      $region49: #{tpu_custom_call.1} parent=5 // pred_check
        %p912 = pneg %p911
      $region50: #{tpu_custom_call.1} parent=5 // pred_check_branch
        %914 = sbr.rel (%p912) target = $region52
      $region51: #{tpu_custom_call.1} parent=5 // pred_region
        %s915 = ssub.s32 %s10, 2
      $region52: #{tpu_custom_call.1} parent=5 // pred_fallthru
        _
    $region6: #{tpu_custom_call.1} parent=1 // loop_footer
      %s14 = sadd.s32 1, %s10
    $region7: #{tpu_custom_call.1} parent=1 // loop_footer_branch
      %9 = sbr.rel target = $region3
    $region8: #{tpu_custom_call.1} parent=1 // loop_exit
      _
    %916 = vsyncpa [#allocation4], 1
    %s917 = scalar_lea.sflag [#allocation4], 1
    %918 = vsyncpa %s917, 1

</llo_original>
